<compile_context>
chip_gen: v6e
topology: v6e:2x2x1
jax: 0.10.0
libtpu: 0.0.40
codegen_flags: <defaults>
</compile_context>

<pallas_src>
import jax
import jax.numpy as jnp
from jax import lax
from jax.experimental import pallas as pl
from jax.experimental.pallas import tpu as pltpu


def _attention_kernel(x_ref, att_ref):
    """Accumulate energy = X @ X^T over spatial tiles, softmax at the end.

    x_ref:   (C, TN) tile of the flattened input for the current batch elem.
    att_ref: (C, C) float32 output block, resident across the spatial axis
             (used as the energy accumulator; overwritten with the softmax).
    """
    n = pl.program_id(1)

    @pl.when(n == 0)
    def _init():
        att_ref[...] = jnp.zeros_like(att_ref)

    xt = x_ref[...].astype(jnp.float32)  # (C, TN)
    # energy[i, j] += sum_n x[i, n] * x[j, n]  (contract the spatial dim).
    att_ref[...] += lax.dot_general(
        xt, xt, (((1,), (1,)), ((), ())), preferred_element_type=jnp.float32
    )

    @pl.when(n == pl.num_programs(1) - 1)
    def _finalize():
        energy = att_ref[...]                                       # (C, C)
        energy_new = jnp.max(energy, axis=-1, keepdims=True) - energy
        # Numerically-stable softmax over the last axis (matches torch).
        m = jnp.max(energy_new, axis=-1, keepdims=True)
        p = jnp.exp(energy_new - m)
        att_ref[...] = p / jnp.sum(p, axis=-1, keepdims=True)


def _apply_kernel(att_ref, x_ref, gamma_ref, o_ref):
    """out_tile = gamma * (attention @ X_tile) + X_tile.

    att_ref:   (C, C) float32 attention for the current batch element.
    x_ref:     (C, TN) input tile.
    gamma_ref: (1,) float32 scalar in SMEM.
    o_ref:     (C, TN) output tile.
    """
    att = att_ref[...]                       # (C, C) f32
    xt = x_ref[...].astype(jnp.float32)      # (C, TN)
    out = jnp.dot(att, xt, preferred_element_type=jnp.float32)
    gamma = gamma_ref[0]
    o_ref[...] = (gamma * out + xt).astype(o_ref.dtype)


def _pick_spatial_tile(N: int, C: int, dtype_bytes: int = 4,
                       per_buffer_budget: int = 1 << 20) -> int:
    """Largest multiple of 128 that divides N and keeps a (C, TN) tile small.

    Bounds per-step VMEM (each tile is double-buffered for input and output)
    so blocking stays under v5e's 16 MiB scoped default and v7x's 64 MiB
    physical VMEM. Falls back to the full extent if N has no 128-multiple
    divisor (a full-extent block is always legal).
    """
    max_tn = max(128, per_buffer_budget // max(1, C * dtype_bytes))
    best = None
    t = 128
    while t <= N:
        if N % t == 0 and t <= max_tn:
            best = t
        t += 128
    return best if best is not None else N


def cam_module(x: jax.Array, gamma: float = 0.0) -> jax.Array:
    """Pallas implementation of CAM_Module.forward (NCHW). gamma=0 at init."""
    B, C, H, W = x.shape
    N = H * W
    xf = x.reshape(B, C, N)  # lane-dense layout: last dim is H*W

    TN = _pick_spatial_tile(N, C)
    NT = N // TN

    # ---- Pass 1: attention = softmax(rowmax(energy) - energy), energy = X X^T
    attention = pl.pallas_call(
        _attention_kernel,
        out_shape=jax.ShapeDtypeStruct((B, C, C), jnp.float32),
        grid=(B, NT),
        in_specs=[pl.BlockSpec((None, C, TN), lambda b, n: (b, 0, n))],
        out_specs=pl.BlockSpec((None, C, C), lambda b, n: (b, 0, 0)),
        compiler_params=pltpu.CompilerParams(
            dimension_semantics=("parallel", "arbitrary")),
    )(xf)

    # ---- Pass 2: out = gamma * (attention @ X) + X, per spatial tile.
    gamma_arr = jnp.asarray([gamma], dtype=jnp.float32)
    out_flat = pl.pallas_call(
        _apply_kernel,
        out_shape=jax.ShapeDtypeStruct((B, C, N), x.dtype),
        grid=(B, NT),
        in_specs=[
            pl.BlockSpec((None, C, C), lambda b, n: (b, 0, 0)),
            pl.BlockSpec((None, C, TN), lambda b, n: (b, 0, n)),
            pl.BlockSpec(memory_space=pltpu.MemorySpace.SMEM),
        ],
        out_specs=pl.BlockSpec((None, C, TN), lambda b, n: (b, 0, n)),
        compiler_params=pltpu.CompilerParams(
            dimension_semantics=("parallel", "parallel")),
    )(attention, xf, gamma_arr)

    return out_flat.reshape(B, C, H, W)


def cam_module_ref(x: jax.Array, gamma: float = 0.0) -> jax.Array:
    """Pure-JAX reference mirroring the PyTorch CAM_Module semantics."""
    B, C, H, W = x.shape
    xf = x.reshape(B, C, H * W).astype(jnp.float32)
    energy = jnp.einsum("bcn,bdn->bcd", xf, xf,
                        precision=lax.Precision.HIGHEST)
    energy_new = jnp.max(energy, axis=-1, keepdims=True) - energy
    attention = jax.nn.softmax(energy_new, axis=-1)
    out = jnp.einsum("bcd,bdn->bcn", attention, xf,
                     precision=lax.Precision.HIGHEST)
    return (gamma * out + xf).reshape(B, C, H, W).astype(x.dtype)


if __name__ == "__main__":
    key = jax.random.PRNGKey(0)
    B, C, H, W = 2, 4, 16, 16
    # Small scale so the channel-attention matrix is non-degenerate and the
    # comparison actually exercises the (max - energy) softmax path.
    x = 0.1 * jax.random.normal(key, (B, C, H, W), dtype=jnp.float32)

    # gamma = 0 matches the PyTorch module's init (torch.tensor(0)).
    out = jax.block_until_ready(cam_module(x, gamma=0.0))
    ref = cam_module_ref(x, gamma=0.0)
    assert out.shape == (B, C, H, W), out.shape
    assert jnp.allclose(out, ref, atol=2e-3, rtol=2e-3), "mismatch (gamma=0)"

    # Also exercise the full attention path (gamma != 0).
    out1 = jax.block_until_ready(cam_module(x, gamma=1.0))
    ref1 = cam_module_ref(x, gamma=1.0)
    assert jnp.allclose(out1, ref1, atol=2e-3, rtol=2e-3), "mismatch (gamma=1)"

    print("KERNEL_OK")
</pallas_src>

<mosaic_0001>
module attributes {stable_mosaic.version = 11 : i64} {
  func.func @_attention_kernel(%arg0: i32, %arg1: i32, %arg2: memref<1x4x256xf32, #tpu.memory_space<vmem>>, %arg3: memref<1x4x4xf32, #tpu.memory_space<vmem>>) attributes {dimension_semantics = [#tpu.dimension_semantics<parallel>, #tpu.dimension_semantics<arbitrary>], iteration_bounds = array<i64: 2, 1>, scalar_prefetch = 0 : i64, scratch_operands = 0 : i64, tpu.core_type = #tpu.core_type<tc>, window_params = [{transform_indices = @transform_0, window_bounds = array<i64: 1, 4, 256>}, {transform_indices = @transform_1, window_bounds = array<i64: 1, 4, 4>}]} {
    %c0_i32 = arith.constant 0 : i32
    %0 = arith.cmpi eq, %arg1, %c0_i32 : i32
    %1 = arith.extui %0 : i1 to i32
    %c0_i32_0 = arith.constant 0 : i32
    %2 = arith.cmpi ne, %1, %c0_i32_0 : i32
    scf.if %2 {
      %cst_11 = arith.constant 0.000000e+00 : f32
      %15 = vector.broadcast %cst_11 : f32 to vector<4x4xf32>
      %c0_12 = arith.constant 0 : index
      %c0_13 = arith.constant 0 : index
      %c0_14 = arith.constant 0 : index
      %16 = vector.load %arg3[%c0_12, %c0_13, %c0_14] : memref<1x4x4xf32, #tpu.memory_space<vmem>>, vector<1x4x4xf32>
      %17 = vector.shape_cast %16 : vector<1x4x4xf32> to vector<4x4xf32>
      %18 = vector.shape_cast %15 : vector<4x4xf32> to vector<1x4x4xf32>
      tpu.vector_store %arg3[%c0_12, %c0_13, %c0_14], %18 {strides = array<i32>} : memref<1x4x4xf32, #tpu.memory_space<vmem>>, vector<1x4x4xf32>,
    } else {
    }
    %c0 = arith.constant 0 : index
    %c0_1 = arith.constant 0 : index
    %c0_2 = arith.constant 0 : index
    %3 = vector.load %arg2[%c0, %c0_1, %c0_2] : memref<1x4x256xf32, #tpu.memory_space<vmem>>, vector<1x4x256xf32>
    %4 = vector.shape_cast %3 : vector<1x4x256xf32> to vector<4x256xf32>
    %c0_3 = arith.constant 0 : index
    %c0_4 = arith.constant 0 : index
    %c0_5 = arith.constant 0 : index
    %5 = vector.load %arg3[%c0_3, %c0_4, %c0_5] : memref<1x4x4xf32, #tpu.memory_space<vmem>>, vector<1x4x4xf32>
    %6 = vector.shape_cast %5 : vector<1x4x4xf32> to vector<4x4xf32>
    %cst = arith.constant dense<0.000000e+00> : vector<4x4xf32>
    %7 = tpu.matmul %4, %4, %cst {dimension_numbers = #tpu.dot_dimension_numbers<[1], [1], [0], [0], [0, 0, 1, 0], [], []>} : vector<4x256xf32>, vector<4x256xf32>, vector<4x4xf32> -> vector<4x4xf32>
    %8 = arith.addf %6, %7 : vector<4x4xf32>
    %c0_6 = arith.constant 0 : index
    %c0_7 = arith.constant 0 : index
    %c0_8 = arith.constant 0 : index
    %9 = vector.load %arg3[%c0_6, %c0_7, %c0_8] : memref<1x4x4xf32, #tpu.memory_space<vmem>>, vector<1x4x4xf32>
    %10 = vector.shape_cast %9 : vector<1x4x4xf32> to vector<4x4xf32>
    %11 = vector.shape_cast %8 : vector<4x4xf32> to vector<1x4x4xf32>
    tpu.vector_store %arg3[%c0_6, %c0_7, %c0_8], %11 {strides = array<i32>} : memref<1x4x4xf32, #tpu.memory_space<vmem>>, vector<1x4x4xf32>,
    %c0_i32_9 = arith.constant 0 : i32
    %12 = arith.cmpi eq, %arg1, %c0_i32_9 : i32
    %13 = arith.extui %12 : i1 to i32
    %c0_i32_10 = arith.constant 0 : i32
    %14 = arith.cmpi ne, %13, %c0_i32_10 : i32
    scf.if %14 {
      %c0_11 = arith.constant 0 : index
      %c0_12 = arith.constant 0 : index
      %c0_13 = arith.constant 0 : index
      %15 = vector.load %arg3[%c0_11, %c0_12, %c0_13] : memref<1x4x4xf32, #tpu.memory_space<vmem>>, vector<1x4x4xf32>
      %16 = vector.shape_cast %15 : vector<1x4x4xf32> to vector<4x4xf32>
      %cst_14 = arith.constant dense<0xFF800000> : vector<4xf32>
      %17 = vector.multi_reduction <maximumf>, %16, %cst_14 [1] : vector<4x4xf32> to vector<4xf32>
      %18 = vector.shape_cast %17 : vector<4xf32> to vector<4x1xf32>
      %19 = vector.broadcast %18 : vector<4x1xf32> to vector<4x4xf32>
      %20 = arith.subf %19, %16 : vector<4x4xf32>
      %cst_15 = arith.constant dense<0xFF800000> : vector<4xf32>
      %21 = vector.multi_reduction <maximumf>, %20, %cst_15 [1] : vector<4x4xf32> to vector<4xf32>
      %22 = vector.shape_cast %21 : vector<4xf32> to vector<4x1xf32>
      %23 = vector.broadcast %22 : vector<4x1xf32> to vector<4x4xf32>
      %24 = arith.subf %20, %23 : vector<4x4xf32>
      %25 = math.exp %24 : vector<4x4xf32>
      %cst_16 = arith.constant dense<0.000000e+00> : vector<4xf32>
      %26 = vector.multi_reduction <add>, %25, %cst_16 [1] : vector<4x4xf32> to vector<4xf32>
      %27 = vector.shape_cast %26 : vector<4xf32> to vector<4x1xf32>
      %28 = vector.broadcast %27 : vector<4x1xf32> to vector<4x4xf32>
      %29 = arith.divf %25, %28 : vector<4x4xf32>
      %c0_17 = arith.constant 0 : index
      %c0_18 = arith.constant 0 : index
      %c0_19 = arith.constant 0 : index
      %30 = vector.load %arg3[%c0_17, %c0_18, %c0_19] : memref<1x4x4xf32, #tpu.memory_space<vmem>>, vector<1x4x4xf32>
      %31 = vector.shape_cast %30 : vector<1x4x4xf32> to vector<4x4xf32>
      %32 = vector.shape_cast %29 : vector<4x4xf32> to vector<1x4x4xf32>
      tpu.vector_store %arg3[%c0_17, %c0_18, %c0_19], %32 {strides = array<i32>} : memref<1x4x4xf32, #tpu.memory_space<vmem>>, vector<1x4x4xf32>,
    } else {
    }
    return
  }
  func.func @transform_0(%arg0: i32, %arg1: i32) -> (i32, i32, i32) {
    %c0_i32 = arith.constant 0 : i32
    %c0_i32_0 = arith.constant 0 : i32
    return %arg0, %c0_i32, %arg1 : i32, i32, i32
  }
  func.func @transform_1(%arg0: i32, %arg1: i32) -> (i32, i32, i32) {
    %c0_i32 = arith.constant 0 : i32
    %c0_i32_0 = arith.constant 0 : i32
    %c0_i32_1 = arith.constant 0 : i32
    return %arg0, %c0_i32, %c0_i32_0 : i32, i32, i32
  }
}

</mosaic_0001>

<llo_original>
// kernel: tpu_custom_call.1
$region0: #{tpu_custom_call.1}
  #allocation0 [shape = 'u32[]', space=smem, size = 0x4, offset = 0x4, fixed_abs, tag = 'smem constant byte address 0x4 - core index']
  #allocation1 [shape = 'u32[144,128]{1,0:T(1,128)}', space=vmem, size = 0x12000, scoped, tag = 'internal scratch']
  %s0 = inlined_call_operand.hbm [shape: f32[2,4,256], index: 0, kind: input, shape index: {}]
  %s1 = inlined_call_operand.hbm [shape: f32[2,4,4], index: 1, kind: output, shape index: {}]
  %s2 = sld [smem:[#allocation0]]
  $region49: #{tpu_custom_call.1} parent=0
    _
  %s4 = ssub.s32 1, %s2
  %s5 = scalar_select 0, %s4, %s2
  $region1: #{tpu_custom_call.1} parent=0
    #allocation2 [shape = 'u8[8192]{0}', space=vmem, size = 0x2000, scoped, tag = 'input window, operand 0']
    #allocation3 [shape = 's32[2]{0}', space=sflag, size = 0x8, scoped, tag = 'scoped memory for tpu_custom_call.1']
    #allocation4 [shape = 's32[2]{0}', space=sflag, size = 0x8, scoped, tag = 'scoped memory for tpu_custom_call.1']
    #allocation5 [shape = 'u8[4096]{0}', space=vmem, size = 0x1000, scoped, tag = 'output window, operand 0']
    %6 = vsyncpa [#allocation3], 0
    %s7 = scalar_lea.sflag [#allocation3], 1
    %8 = vsyncpa %s7, 0
    %9 = vsyncpa [#allocation4], 0
    %s10 = scalar_lea.sflag [#allocation4], 1
    %11 = vsyncpa %s10, 0
    loop: start=0, step=1, limit=4
    $region2: #{tpu_custom_call.1} parent=1 // loop_pre_header
      _
    $region3: #{tpu_custom_call.1} parent=1 // loop_header
      %s13 = sphi 0, %s17
      %p14 = scmp.ge.s32.totalorder %s13, 4
      %s20 = sphi 0, %s32
      %s21 = sphi 0, %s28
      %s22 = sphi 0, %s20
      %s23 = sphi 0, %s21
      %s24 = sphi 0, %s22
      %s25 = sphi 0, %s23
      %s37 = sphi 0, %s39
      %s40 = sphi 0, %s37
      %s41 = sphi 0, %s40
      %s57 = sphi 0, %s41
      %s63 = sphi 0, %s65
      %s66 = sphi 0, %s63
      %s67 = sphi 0, %s66
      %s83 = sphi 0, %s67
    $region4: #{tpu_custom_call.1} parent=1 // loop_header_branch
      %16 = sbr.rel (%p14) target = $region8
    $region5: #{tpu_custom_call.1} parent=1 // loop_body
      %s18 = ssub.s32 %s13, 1
      %s19 = ssub.s32 %s13, 2
      %s26 = sadd.s32 1, %s21
      %p27 = scmp.ge.s32.totalorder %s26, 1
      %s28 = scalar_select %p27, 0, %s26
      %s29 = sadd.s32 1, %s20
      %s30 = scalar_select %p27, %s29, %s20
      %p31 = scmp.ge.s32.totalorder %s30, 2
      %s32 = scalar_select %p31, 0, %s30
      %s33 = ssub.s32 %s20, %s32
      %s34 = ssub.s32 %s21, %s28
      %s35 = sor.u32 %s33, %s34
      %p36 = scmp.eq.s32.totalorder %s35, 0
      %s38 = sadd.s32 %s37, 1
      %s39 = scalar_select %p36, %s37, %s38
      %p42 = pneg %p36
      %p43 = scmp.eq.s32.totalorder %s13, 1
      %p44 = por %p42, %p43
      %p45 = scmp.ne.s32.totalorder %s37, %s40
      %p46 = scmp.eq.s32.totalorder %s13, 0
      %p47 = por %p45, %p46
      %p48 = scmp.ne.s32.totalorder %s37, %s40
      %p49 = scmp.eq.s32.totalorder %s18, 1
      %p50 = por %p48, %p49
      %p51 = scmp.ne.s32.totalorder %s40, %s41
      %p52 = scmp.eq.s32.totalorder %s18, 0
      %p53 = por %p51, %p52
      %p54 = scmp.ne.s32.totalorder %s40, %s41
      %p55 = scmp.eq.s32.totalorder %s19, 1
      %p56 = por %p54, %p55
      %p58 = scmp.ne.s32.totalorder %s41, %s57
      %p59 = scmp.eq.s32.totalorder %s19, 0
      %p60 = por %p58, %p59
      %s61 = ssub.s32 %s20, %s32
      %p62 = scmp.eq.s32.totalorder %s61, 0
      %s64 = sadd.s32 %s63, 1
      %s65 = scalar_select %p62, %s63, %s64
      %p68 = pneg %p62
      %p69 = scmp.eq.s32.totalorder %s13, 1
      %p70 = por %p68, %p69
      %p71 = scmp.ne.s32.totalorder %s63, %s66
      %p72 = scmp.eq.s32.totalorder %s13, 0
      %p73 = por %p71, %p72
      %p74 = scmp.ne.s32.totalorder %s63, %s66
      %p75 = scmp.eq.s32.totalorder %s18, 1
      %p76 = por %p74, %p75
      %p77 = scmp.ne.s32.totalorder %s66, %s67
      %p78 = scmp.eq.s32.totalorder %s18, 0
      %p79 = por %p77, %p78
      %p80 = scmp.ne.s32.totalorder %s66, %s67
      %p81 = scmp.eq.s32.totalorder %s19, 1
      %p82 = por %p80, %p81
      %p84 = scmp.ne.s32.totalorder %s67, %s83
      %p85 = scmp.eq.s32.totalorder %s19, 0
      %p86 = por %p84, %p85
      %p87 = scmp.le.s32.totalorder 1, %s13
      %p88 = scmp.lt.s32.totalorder %s13, 3
      %p89 = pnand %p87, %p88
      %p90 = pneg %p89
      // Predicated region
      $region9: #{tpu_custom_call.1} parent=5 // pred_check
        _
      $region10: #{tpu_custom_call.1} parent=5 // pred_check_branch
        %92 = sbr.rel (%p89) target = $region12
      $region11: #{tpu_custom_call.1} parent=5 // pred_region
        %s93 = ssub.s32 %s13, 1
      $region12: #{tpu_custom_call.1} parent=5 // pred_fallthru
        _
      %p94 = scmp.lt.s32.totalorder %s13, 2
      // Predicated region
      $region13: #{tpu_custom_call.1} parent=5 // pred_check
        %p95 = pneg %p94
      $region14: #{tpu_custom_call.1} parent=5 // pred_check_branch
        %97 = sbr.rel (%p95) target = $region16
      $region15: #{tpu_custom_call.1} parent=5 // pred_region
        // Predicated region
        $region17: #{tpu_custom_call.1} parent=15 // pred_check
          %p98 = pneg %p47
        $region18: #{tpu_custom_call.1} parent=15 // pred_check_branch
          %100 = sbr.rel (%p98) target = $region20
        $region19: #{tpu_custom_call.1} parent=15 // pred_region
          %s101 = sand.u32 %s37, 1
          %s102 = scalar_lea.sflag [#allocation3], %s101
          %s103 = sand.u32 %s37, 1
          %s104 = smul.addr %s103, 8
          %s105 = scalar_lea.vmem [#allocation2], %s104
          %s106 = smul.u32 2, %s21
          %s108 = ssub.s32 128, 128
          %109 = vsyncadd %s102, %s108
          %s110 = smul.addr %s20, 2
          %s111 = sadd.s32 %s106, %s110
          %s112 = smul.addr %s111, 64
          %s113 = scalar_lea.hbm %s0, %s112
          %s115 = sshll.u32 %s105, 4
          %s116 = int_to_ptr.vmem [resolvable:$true] %s115
          %118 = dma.hbm_to_vmem [thread:$0]  %s113, 128, %s116, %s102
        $region20: #{tpu_custom_call.1} parent=15 // pred_fallthru
          _
      $region16: #{tpu_custom_call.1} parent=5 // pred_fallthru
        _
      %p119 = scmp.le.s32.totalorder 1, %s13
      %p120 = scmp.lt.s32.totalorder %s13, 3
      %p121 = pnand %p119, %p120
      %p122 = pneg %p121
      // Predicated region
      $region21: #{tpu_custom_call.1} parent=5 // pred_check
        _
      $region22: #{tpu_custom_call.1} parent=5 // pred_check_branch
        %124 = sbr.rel (%p121) target = $region24
      $region23: #{tpu_custom_call.1} parent=5 // pred_region
        %s125 = ssub.s32 %s13, 1
        %s126 = sand.u32 %s40, 1
        %s127 = scalar_lea.sflag [#allocation3], %s126
        %s128 = sand.u32 %s40, 1
        %s129 = smul.addr %s128, 8
        %s130 = scalar_lea.vmem [#allocation2], %s129
        // Predicated region
        $region25: #{tpu_custom_call.1} parent=23 // pred_check
          %p131 = pneg %p53
        $region26: #{tpu_custom_call.1} parent=23 // pred_check_branch
          %133 = sbr.rel (%p131) target = $region28
        $region27: #{tpu_custom_call.1} parent=23 // pred_region
          %134 = dma.done %s127, 128
        $region28: #{tpu_custom_call.1} parent=23 // pred_fallthru
          _
        %s135 = sand.u32 %s40, 1
        %s136 = scalar_lea.sflag [#allocation3], %s135
        %s137 = sand.u32 %s40, 1
        %s138 = smul.addr %s137, 8
        %s139 = scalar_lea.vmem [#allocation2], %s138
        %p140 = pneg %p53
        %p141 = pneg %p50
        %p142 = pneg %p79
        %p143 = pneg %p76
        %s144 = sand.u32 %s66, 1
        %s145 = scalar_lea.sflag [#allocation4], %s144
        %s146 = sand.u32 %s66, 1
        %s147 = smul.addr %s146, 4
        %s148 = scalar_lea.vmem [#allocation5], %s147
        %s149 = smul.u32 2, %s23
        %p150 = scmp.eq.s32.totalorder %s23, 0
        // Predicated region
        $region29: #{tpu_custom_call.1} parent=23 // pred_check
          %p151 = pneg %p150
        $region30: #{tpu_custom_call.1} parent=23 // pred_check_branch
          %153 = sbr.rel (%p151) target = $region32
        $region31: #{tpu_custom_call.1} parent=23 // pred_region
          %vm154 = vcmask 27648
          %155 = vst.msk [vmem:[%s148] sm:$0xf] %vm154, 0.0
        $region32: #{tpu_custom_call.1} parent=23 // pred_fallthru
          _
        %v156 = vld [vmem:[%s130] sm:$0xff]
        %v157 = vld [vmem:[%s148] sm:$0xf]
        %v159 = vcombine.high %v156, %v156
        %161 = vmatprep.subr.mxu0 0.0
        %162 = vmatpush1.xpose.msra.mxu0 0.0
        %163 = vmatprep.subr.mxu0 0.0
        %164 = vmatpush1.xpose.msra.mxu0 0.0
        %165 = vmatprep.subr.mxu0 0.0
        %166 = vmatpush1.xpose.msra.mxu0 0.0
        %167 = vmatprep.subr.mxu0 0.0
        %168 = vmatpush1.xpose.msra.mxu0 0.0
        %169 = vmatprep.subr.mxu0 0.0
        %170 = vmatpush1.xpose.msra.mxu0 0.0
        %171 = vmatprep.subr.mxu0 0.0
        %172 = vmatpush1.xpose.msra.mxu0 0.0
        %173 = vmatprep.subr.mxu0 0.0
        %174 = vmatpush1.xpose.msra.mxu0 0.0
        %175 = vmatprep.subr.mxu0 0.0
        %176 = vmatpush1.xpose.msra.mxu0 0.0
        %177 = vmatprep.subr.mxu0 0.0
        %178 = vmatpush1.xpose.msra.mxu0 0.0
        %179 = vmatprep.subr.mxu0 0.0
        %180 = vmatpush1.xpose.msra.mxu0 0.0
        %181 = vmatprep.subr.mxu0 0.0
        %182 = vmatpush1.xpose.msra.mxu0 0.0
        %183 = vmatprep.subr.mxu0 0.0
        %184 = vmatpush1.xpose.msra.mxu0 0.0
        %185 = vmatprep.subr.mxu0 0.0
        %186 = vmatpush1.xpose.msra.mxu0 0.0
        %187 = vmatprep.subr.mxu0 0.0
        %188 = vmatpush1.xpose.msra.mxu0 0.0
        %189 = vmatprep.subr.mxu0 0.0
        %190 = vmatpush1.xpose.msra.mxu0 0.0
        %191 = vmatprep.subr.mxu0 %v159
        %192 = vmatpush1.xpose.msra.mxu0 %v156
        %193 = vmatprep.subr.mxu0 0.0
        %194 = vmatpush2.xpose.msra.mxu0 0.0
        %195 = vmatprep.subr.mxu0 0.0
        %196 = vmatpush2.xpose.msra.mxu0 0.0
        %197 = vmatprep.subr.mxu0 0.0
        %198 = vmatpush2.xpose.msra.mxu0 0.0
        %199 = vmatprep.subr.mxu0 0.0
        %200 = vmatpush2.xpose.msra.mxu0 0.0
        %201 = vmatprep.subr.mxu0 0.0
        %202 = vmatpush2.xpose.msra.mxu0 0.0
        %203 = vmatprep.subr.mxu0 0.0
        %204 = vmatpush2.xpose.msra.mxu0 0.0
        %205 = vmatprep.subr.mxu0 0.0
        %206 = vmatpush2.xpose.msra.mxu0 0.0
        %207 = vmatprep.subr.mxu0 0.0
        %208 = vmatpush2.xpose.msra.mxu0 0.0
        %209 = vmatprep.subr.mxu0 0.0
        %210 = vmatpush2.xpose.msra.mxu0 0.0
        %211 = vmatprep.subr.mxu0 0.0
        %212 = vmatpush2.xpose.msra.mxu0 0.0
        %213 = vmatprep.subr.mxu0 0.0
        %214 = vmatpush2.xpose.msra.mxu0 0.0
        %215 = vmatprep.subr.mxu0 0.0
        %216 = vmatpush2.xpose.msra.mxu0 0.0
        %217 = vmatprep.subr.mxu0 0.0
        %218 = vmatpush2.xpose.msra.mxu0 0.0
        %219 = vmatprep.subr.mxu0 0.0
        %220 = vmatpush2.xpose.msra.mxu0 0.0
        %221 = vmatprep.subr.mxu0 0.0
        %222 = vmatpush2.xpose.msra.mxu0 0.0
        %223 = vmatprep.subr.mxu0 0.0
        %224 = vmatpush2.xpose.msra.mxu0 0.0
        %225 = vmatprep.mubr.f32.mxu0 %v159
        %226 = vmatmul.mubr.f32.gmra.mxu0 %v156
        %v227 = vpop.f32.mrf.mxu0
        %v228 = vadd.f32 0.0, %v227
        %v229 = vpop.f32.mrf.mxu0
        %230 = vdwg.mxu0
        %v231 = vadd.f32 %v157, %v228
        %vm232 = vcmask 27648
        %233 = vst.msk [vmem:[%s148] sm:$0xf] %vm232, %v231
        // Predicated region
        $region33: #{tpu_custom_call.1} parent=23 // pred_check
          %p234 = pneg %p150
        $region34: #{tpu_custom_call.1} parent=23 // pred_check_branch
          %236 = sbr.rel (%p234) target = $region36
        $region35: #{tpu_custom_call.1} parent=23 // pred_region
          %v237 = vld [vmem:[%s148] sm:$0xf]
          %v238 = vsel %vm232, %v237, -inf
          %239 = vmax.xlane.f32.xlu0 %v238
          %v240 = vpop.xlane.xlu0 %239
          %v241 = vsub.f32 %v240, %v237
          %v242 = vsel %vm232, %v241, -inf
          %243 = vmax.xlane.f32.xlu0 %v242
          %v244 = vpop.xlane.xlu0 %243
          %v245 = vsub.f32 %v241, %v244
          %v246 = vmul.f32 %v245, 1.442695
          %v247 = vpow.pop %v246
          %v248 = vsel %vm232, %v247, 0.0
          %249 = vadd.xlane.f32.xlu0 %v248
          %v250 = vpop.xlane.xlu0 %249
          %v251 = vrcp.pop %v250
          %v252 = vmul.f32 %v247, %v251
          %253 = vst.msk [vmem:[%s148] sm:$0xf] %vm232, %v252
        $region36: #{tpu_custom_call.1} parent=23 // pred_fallthru
          _
        %s254 = sand.u32 %s66, 1
        %s255 = scalar_lea.sflag [#allocation4], %s254
        %s256 = sand.u32 %s66, 1
        %s257 = smul.addr %s256, 4
        %s258 = scalar_lea.vmem [#allocation5], %s257
        // Predicated region
        $region37: #{tpu_custom_call.1} parent=23 // pred_check
          %p259 = pneg %p76
        $region38: #{tpu_custom_call.1} parent=23 // pred_check_branch
          %261 = sbr.rel (%p259) target = $region40
        $region39: #{tpu_custom_call.1} parent=23 // pred_region
          %s263 = ssub.s32 64, 64
          %264 = vsyncadd %s255, %s263
          %s265 = smul.addr %s22, 64
          %s266 = scalar_lea.hbm %s1, %s265
          %s268 = sshll.u32 %s258, 4
          %s269 = int_to_ptr.vmem [resolvable:$true] %s268
          %271 = dma.vmem_to_hbm [thread:$0]  %s269, 64, %s266, %s255
        $region40: #{tpu_custom_call.1} parent=23 // pred_fallthru
          _
      $region24: #{tpu_custom_call.1} parent=5 // pred_fallthru
        _
      %p272 = scmp.le.s32.totalorder 2, %s13
      // Predicated region
      $region41: #{tpu_custom_call.1} parent=5 // pred_check
        %p273 = pneg %p272
      $region42: #{tpu_custom_call.1} parent=5 // pred_check_branch
        %275 = sbr.rel (%p273) target = $region44
      $region43: #{tpu_custom_call.1} parent=5 // pred_region
        %s276 = ssub.s32 %s13, 2
        // Predicated region
        $region45: #{tpu_custom_call.1} parent=43 // pred_check
          %p277 = pneg %p82
        $region46: #{tpu_custom_call.1} parent=43 // pred_check_branch
          %279 = sbr.rel (%p277) target = $region48
        $region47: #{tpu_custom_call.1} parent=43 // pred_region
          %s280 = sand.u32 %s67, 1
          %s281 = scalar_lea.sflag [#allocation4], %s280
          %s282 = sand.u32 %s67, 1
          %s283 = smul.addr %s282, 4
          %s284 = scalar_lea.vmem [#allocation5], %s283
          %285 = dma.done %s281, 64
        $region48: #{tpu_custom_call.1} parent=43 // pred_fallthru
          _
      $region44: #{tpu_custom_call.1} parent=5 // pred_fallthru
        _
    $region6: #{tpu_custom_call.1} parent=1 // loop_footer
      %s17 = sadd.s32 1, %s13
    $region7: #{tpu_custom_call.1} parent=1 // loop_footer_branch
      %12 = sbr.rel target = $region3
    $region8: #{tpu_custom_call.1} parent=1 // loop_exit
      _
    %286 = vsyncpa [#allocation3], 1
    %s287 = scalar_lea.sflag [#allocation3], 1
    %288 = vsyncpa %s287, 1
    %289 = vsyncpa [#allocation4], 1
    %s290 = scalar_lea.sflag [#allocation4], 1
    %291 = vsyncpa %s290, 1

</llo_original>
